<compile_context>
chip_gen: v7x
topology: tpu7x:2x2x1
jax: 0.10.0
libtpu: 0.0.40
codegen_flags: <defaults>
</compile_context>

<pallas_src>
import functools

import jax
import jax.numpy as jnp
from jax import lax
from jax.experimental import pallas as pl
from jax.experimental.pallas import tpu as pltpu

_OUT_SUB = 8      # sublane extent of the lane-dense per-tile partial-sum block
_LANES = 128


# --------------------------------------------------------------------------- #
# Kernels
# --------------------------------------------------------------------------- #
def _ce_rows_kernel(pred_ref, tgt_ref, out_ref, *, num_classes, smoothing,
                    n_rows, tile_m, mask_rows):
    """General path: one logical row per physical row (last dim = C)."""
    i = pl.program_id(0)
    x = pred_ref[...].astype(jnp.float32)                     # (tm, C)
    tm, n_cls = x.shape

    m = jnp.max(x, axis=-1, keepdims=True)                    # (tm, 1)
    xm = x - m                                                 # x dies here
    lse = jnp.log(jnp.sum(jnp.exp(xm), axis=-1, keepdims=True))
    sum_logp = jnp.sum(xm, axis=-1, keepdims=True) - jnp.float32(n_cls) * lse

    col = lax.broadcasted_iota(jnp.int32, (tm, n_cls), 1)
    xm_t = jnp.sum(jnp.where(col == tgt_ref[...], xm, 0.0),
                   axis=-1, keepdims=True)
    logp_t = xm_t - lse                                        # (tm, 1)

    sv = smoothing / (num_classes - 1)
    c1 = (1.0 - smoothing) - sv
    per_row = -(jnp.float32(sv) * sum_logp + jnp.float32(c1) * logp_t)

    if mask_rows:
        # Output-side select only; padded rows may carry garbage/NaN internally.
        row = i * tile_m + lax.broadcasted_iota(jnp.int32, (tm, 1), 0)
        per_row = jnp.where(row < n_rows, per_row, 0.0)

    out_ref[...] = jnp.full(out_ref.shape, jnp.sum(per_row), dtype=out_ref.dtype)


def _ce_packed_kernel(pred_ref, tgt_ref, out_ref, *, num_classes, smoothing,
                      n_rows, tile_m, pack, mask_rows):
    """Lane-packed path: `pack` logical rows (C classes each) per 128-lane row."""
    i = pl.program_id(0)
    c = num_classes
    x = pred_ref[...].astype(jnp.float32)                      # (tm, 128)
    tm, w = x.shape                                             # w == pack*c == 128

    # Physical-row max (>= every packed row's max) keeps exp() <= 1.
    # TODO(synk): exact per-segment max needs an XLU shuffle/relayout; with the
    # row max, a valid row only loses accuracy if its logits sit > ~87 below a
    # neighbouring packed row's max (f32 exp underflow) -- negligible in practice.
    m = jnp.max(x, axis=-1, keepdims=True)
    xm = x - m
    e = jnp.exp(xm)                                             # in (0, 1]

    # Segmented (per logical row) sums on the otherwise-idle MXU: block-diagonal
    # ones matrix; 2-pass bf16 split keeps the result f32-accurate regardless of
    # the default matmul precision.
    seg_i = lax.broadcasted_iota(jnp.int32, (w, w), 0) // c
    seg_j = lax.broadcasted_iota(jnp.int32, (w, w), 1) // c
    blk = (seg_i == seg_j).astype(jnp.bfloat16)                 # (128, 128)
    e_hi = e.astype(jnp.bfloat16)
    e_lo = (e - e_hi.astype(jnp.float32)).astype(jnp.bfloat16)
    seg_sum = (jnp.dot(e_hi, blk, preferred_element_type=jnp.float32)
               + jnp.dot(e_lo, blk, preferred_element_type=jnp.float32))
    log_seg = jnp.log(seg_sum)                                  # same value across a segment

    # Broadcast each segment's target class across its C lanes (tiny exact matmul).
    sel = (lax.broadcasted_iota(jnp.int32, (pack, w), 1) // c ==
           lax.broadcasted_iota(jnp.int32, (pack, w), 0)).astype(jnp.float32)
    tgt_b = jnp.dot(tgt_ref[...].astype(jnp.float32), sel,
                    preferred_element_type=jnp.float32)         # (tm, 128)
    col_in_seg = (lax.broadcasted_iota(jnp.int32, (tm, w), 1) % c).astype(jnp.float32)
    tmask = col_in_seg == tgt_b

    asum = jnp.sum(xm, axis=-1, keepdims=True)                  # over all packed rows
    lsum = jnp.sum(log_seg, axis=-1, keepdims=True)             # = C * sum_seg log(seg_sum)
    tsum = jnp.sum(jnp.where(tmask, xm, 0.0), axis=-1, keepdims=True)

    sv = smoothing / (num_classes - 1)
    c1 = (1.0 - smoothing) - sv
    # Summed over the `pack` logical rows in each physical row:
    #   sum_r sum_logp_r = asum - lsum ;  sum_r logp_t_r = tsum - lsum / C
    loss_p = -(jnp.float32(sv) * (asum - lsum)
               + jnp.float32(c1) * (tsum - lsum / jnp.float32(c)))   # (tm, 1)

    if mask_rows:
        prow = i * tile_m + lax.broadcasted_iota(jnp.int32, (tm, 1), 0)
        loss_p = jnp.where(prow < n_rows, loss_p, 0.0)

    out_ref[...] = jnp.full(out_ref.shape, jnp.sum(loss_p), dtype=out_ref.dtype)


# --------------------------------------------------------------------------- #
# Wrapper
# --------------------------------------------------------------------------- #
def _budgets():
    """(target f32-equivalent block bytes, vmem_limit_bytes), generation aware."""
    try:
        vmem = int(getattr(pltpu.get_tpu_info(), "vmem_capacity_bytes", 0) or 0)
    except Exception:
        vmem = 0
    if vmem >= 96 * 1024 * 1024:          # v5e / v6e: 128 MiB VMEM -> big blocks
        return 4 << 20, 64 << 20
    return 2 << 20, 32 << 20              # v7x (64 MiB) / unknown: conservative


def _round_tile(tm, rows):
    """Clamp to rows; keep a multiple of 8 so blocks (and MXU M) stay aligned."""
    if rows <= 8:
        return rows
    tm = max(8, min(int(tm), rows))
    return max(8, (tm // 8) * 8)


def _choose_tile_m(rows, row_f32_bytes, target_block_bytes):
    """Byte-budgeted batch tile: no row cap, no forced minimum step count."""
    total = rows * row_f32_bytes
    if total <= (1 << 20):                # tiny problem: one step is cheapest
        return _round_tile(rows, rows)
    tm = target_block_bytes // max(1, row_f32_bytes)
    if tm >= rows:
        tm = -(-rows // 2)                # >= 2 steps so both v7x TCs get work
    return _round_tile(max(8, tm), rows)


@functools.partial(jax.jit, static_argnames=("num_classes", "smoothing", "tile_m"))
def ce_loss_smooth(pred, target, *, num_classes, smoothing=0.1, tile_m=None):
    """pred: (N, C) float (any float dtype), target: (N,) int -> scalar f32 loss.

    `tile_m` (optional) is the number of *physical* rows per grid step.
    """
    n, c = pred.shape
    assert c == num_classes
    itemsize = jnp.dtype(pred.dtype).itemsize
    target = target.astype(jnp.int32)

    # Lane packing: fold k = 128 // C consecutive batch rows into one 128-lane
    # row (free contiguous reshape) so the VPU/EUP see full vregs for C < 128.
    pack = _LANES // c if (c < _LANES and _LANES % c == 0) else 0
    if pack and (n % pack == 0) and (n // pack) >= 8:
        rows, lanes = n // pack, _LANES
        pred2 = pred.reshape(rows, lanes)
        tgt2 = target.reshape(rows, pack)
        kernel_fn = _ce_packed_kernel
        extra = dict(pack=pack)
    else:
        pack = 0
        rows, lanes = n, c
        pred2 = pred
        tgt2 = target.reshape(n, 1)
        kernel_fn = _ce_rows_kernel
        extra = {}

    target_block_bytes, vmem_limit = _budgets()
    if tile_m is None:
        tile_m = _choose_tile_m(rows, lanes * 4, target_block_bytes)
    tile_m = _round_tile(tile_m, rows)
    grid = pl.cdiv(rows, tile_m)
    mask_rows = (rows % tile_m) != 0

    kernel = functools.partial(
        kernel_fn, num_classes=num_classes, smoothing=float(smoothing),
        n_rows=rows, tile_m=tile_m, mask_rows=mask_rows, **extra)

    cost = pl.CostEstimate(
        flops=12 * n * c,
        transcendentals=n * c + n,
        bytes_accessed=n * c * itemsize + n * 4 + grid * _OUT_SUB * _LANES * 4)

    partials = pl.pallas_call(
        kernel,
        out_shape=jax.ShapeDtypeStruct((_OUT_SUB, grid * _LANES), jnp.float32),
        grid_spec=pltpu.PrefetchScalarGridSpec(
            num_scalar_prefetch=0,
            grid=(grid,),
            in_specs=[
                # pred stays in its native dtype; the f32 cast happens in-kernel.
                pl.BlockSpec((tile_m, lanes), lambda i: (i, 0)),
                pl.BlockSpec((tile_m, tgt2.shape[1]), lambda i: (i, 0)),
            ],
            # Lane-dense per-tile partial-sum slab (no (N,1) masked-store column).
            out_specs=pl.BlockSpec((_OUT_SUB, _LANES), lambda i: (0, i)),
        ),
        compiler_params=pltpu.CompilerParams(
            dimension_semantics=("parallel",),
            vmem_limit_bytes=vmem_limit,
        ),
        cost_estimate=cost,
    )(pred2, tgt2)

    # O(grid) bytes of writeback; each (8,128) block holds one partial sum.
    return jnp.sum(partials[0, ::_LANES]) / jnp.float32(n)


# --------------------------------------------------------------------------- #
# Reference + self-test
# --------------------------------------------------------------------------- #
def _reference(pred, target, num_classes, smoothing=0.1):
    logp = jax.nn.log_softmax(pred.astype(jnp.float32), axis=-1)
    sv = smoothing / (num_classes - 1)
    onehot = jax.nn.one_hot(target, num_classes, dtype=jnp.float32)
    labels = jnp.full_like(logp, sv) * (1.0 - onehot) + (1.0 - smoothing) * onehot
    return jnp.mean(-jnp.sum(labels * logp, axis=-1))


if __name__ == "__main__":
    num_classes = 32
    smoothing = 0.1
    key = jax.random.PRNGKey(0)
    k1, k2, k3, k4, k5, k6, k7, k8 = jax.random.split(key, 8)

    def check(got, want, tol, tag):
        got = jax.block_until_ready(got)
        assert jnp.allclose(got, want, atol=tol, rtol=tol), (tag, got, want)

    # Case 1: tiny batch -> general row path, single tile.
    pred1 = jax.random.normal(k1, (8, num_classes), dtype=jnp.float32)
    tgt1 = jax.random.randint(k2, (8,), 0, num_classes, dtype=jnp.int32)
    check(ce_loss_smooth(pred1, tgt1, num_classes=num_classes, smoothing=smoothing),
          _reference(pred1, tgt1, num_classes, smoothing), 1e-4, "rows/single")

    # Case 2: lane-packed path (C=32 -> 4 rows per 128-lane row), ragged
    # multi-step grid (50 packed rows, tile 16) exercising the row mask.
    pred2 = jax.random.normal(k3, (200, num_classes), dtype=jnp.float32)
    tgt2 = jax.random.randint(k4, (200,), 0, num_classes, dtype=jnp.int32)
    check(ce_loss_smooth(pred2, tgt2, num_classes=num_classes,
                         smoothing=smoothing, tile_m=16),
          _reference(pred2, tgt2, num_classes, smoothing), 1e-4, "packed/ragged")

    # Case 3: native bf16 input on the packed path, default tile selection.
    pred3 = jax.random.normal(k5, (256, num_classes), dtype=jnp.bfloat16)
    tgt3 = jax.random.randint(k6, (256,), 0, num_classes, dtype=jnp.int32)
    check(ce_loss_smooth(pred3, tgt3, num_classes=num_classes, smoothing=smoothing),
          _reference(pred3.astype(jnp.float32), tgt3, num_classes, smoothing),
          1e-4, "packed/bf16")

    # Case 4: C that does not divide 128 -> general row path, ragged grid.
    c4 = 48
    pred4 = jax.random.normal(k7, (20, c4), dtype=jnp.float32)
    tgt4 = jax.random.randint(k8, (20,), 0, c4, dtype=jnp.int32)
    check(ce_loss_smooth(pred4, tgt4, num_classes=c4, smoothing=smoothing, tile_m=8),
          _reference(pred4, tgt4, c4, smoothing), 1e-4, "rows/ragged")

    print("KERNEL_OK")
</pallas_src>

<mosaic_0001>
module attributes {stable_mosaic.version = 11 : i64} {
  func.func @_ce_rows_kernel(%arg0: i32, %arg1: memref<8x32xf32, #tpu.memory_space<vmem>>, %arg2: memref<8x1xi32, #tpu.memory_space<vmem>>, %arg3: memref<8x128xf32, #tpu.memory_space<vmem>>) attributes {dimension_semantics = [#tpu.dimension_semantics<parallel>], iteration_bounds = array<i64: 1>, scalar_prefetch = 0 : i64, scratch_operands = 0 : i64, tpu.core_type = #tpu.core_type<tc>, window_params = [{transform_indices = @transform_0, window_bounds = array<i64: 8, 32>}, {transform_indices = @transform_1, window_bounds = array<i64: 8, 1>}, {transform_indices = @transform_2, window_bounds = array<i64: 8, 128>}]} {
    %c0 = arith.constant 0 : index
    %c0_0 = arith.constant 0 : index
    %0 = vector.load %arg1[%c0, %c0_0] : memref<8x32xf32, #tpu.memory_space<vmem>>, vector<8x32xf32>
    %cst = arith.constant dense<0xFF800000> : vector<8xf32>
    %1 = vector.multi_reduction <maximumf>, %0, %cst [1] : vector<8x32xf32> to vector<8xf32>
    %2 = vector.shape_cast %1 : vector<8xf32> to vector<8x1xf32>
    %3 = vector.broadcast %2 : vector<8x1xf32> to vector<8x32xf32>
    %4 = arith.subf %0, %3 : vector<8x32xf32>
    %5 = math.exp %4 : vector<8x32xf32>
    %cst_1 = arith.constant dense<0.000000e+00> : vector<8xf32>
    %6 = vector.multi_reduction <add>, %5, %cst_1 [1] : vector<8x32xf32> to vector<8xf32>
    %7 = vector.shape_cast %6 : vector<8xf32> to vector<8x1xf32>
    %8 = math.log %7 : vector<8x1xf32>
    %cst_2 = arith.constant dense<0.000000e+00> : vector<8xf32>
    %9 = vector.multi_reduction <add>, %4, %cst_2 [1] : vector<8x32xf32> to vector<8xf32>
    %10 = vector.shape_cast %9 : vector<8xf32> to vector<8x1xf32>
    %cst_3 = arith.constant 3.200000e+01 : f32
    %11 = vector.broadcast %cst_3 : f32 to vector<8x1xf32>
    %12 = arith.mulf %11, %8 : vector<8x1xf32>
    %13 = arith.subf %10, %12 : vector<8x1xf32>
    %14 = tpu.iota {dimensions = array<i32: 1>} : vector<8x32xi32>
    %c0_4 = arith.constant 0 : index
    %c0_5 = arith.constant 0 : index
    %15 = vector.load %arg2[%c0_4, %c0_5] : memref<8x1xi32, #tpu.memory_space<vmem>>, vector<8x1xi32>
    %16 = vector.broadcast %15 : vector<8x1xi32> to vector<8x32xi32>
    %17 = arith.cmpi eq, %14, %16 : vector<8x32xi32>
    %cst_6 = arith.constant 0.000000e+00 : f32
    %18 = vector.broadcast %cst_6 : f32 to vector<8x32xf32>
    %19 = arith.select %17, %4, %18 : vector<8x32xi1>, vector<8x32xf32>
    %cst_7 = arith.constant dense<0.000000e+00> : vector<8xf32>
    %20 = vector.multi_reduction <add>, %19, %cst_7 [1] : vector<8x32xf32> to vector<8xf32>
    %21 = vector.shape_cast %20 : vector<8xf32> to vector<8x1xf32>
    %22 = arith.subf %21, %8 : vector<8x1xf32>
    %cst_8 = arith.constant 0.0032258064 : f32
    %23 = vector.broadcast %cst_8 : f32 to vector<8x1xf32>
    %24 = arith.mulf %23, %13 : vector<8x1xf32>
    %cst_9 = arith.constant 0.896774172 : f32
    %25 = vector.broadcast %cst_9 : f32 to vector<8x1xf32>
    %26 = arith.mulf %25, %22 : vector<8x1xf32>
    %27 = arith.addf %24, %26 : vector<8x1xf32>
    %cst_10 = arith.constant 0.000000e+00 : f32
    %28 = vector.broadcast %cst_10 : f32 to vector<8x1xf32>
    %29 = arith.subf %28, %27 : vector<8x1xf32>
    %30 = vector.shape_cast %29 : vector<8x1xf32> to vector<1x8x1xf32>
    %cst_11 = arith.constant dense<0.000000e+00> : vector<1xf32>
    %31 = vector.multi_reduction <add>, %30, %cst_11 [1, 2] : vector<1x8x1xf32> to vector<1xf32>
    %32 = vector.shape_cast %31 : vector<1xf32> to vector<1x1x1xf32>
    %33 = vector.extract %32[0, 0, 0] : f32 from vector<1x1x1xf32>
    %34 = vector.broadcast %33 : f32 to vector<8x128xf32>
    %c0_12 = arith.constant 0 : index
    %c0_13 = arith.constant 0 : index
    %35 = vector.load %arg3[%c0_12, %c0_13] : memref<8x128xf32, #tpu.memory_space<vmem>>, vector<8x128xf32>
    tpu.vector_store %arg3[%c0_12, %c0_13], %34 {strides = array<i32>} : memref<8x128xf32, #tpu.memory_space<vmem>>, vector<8x128xf32>,
    return
  }
  func.func @transform_0(%arg0: i32) -> (i32, i32) {
    %c0_i32 = arith.constant 0 : i32
    %c0_i32_0 = arith.constant 0 : i32
    return %arg0, %c0_i32 : i32, i32
  }
  func.func @transform_1(%arg0: i32) -> (i32, i32) {
    %c0_i32 = arith.constant 0 : i32
    %c0_i32_0 = arith.constant 0 : i32
    return %arg0, %c0_i32 : i32, i32
  }
  func.func @transform_2(%arg0: i32) -> (i32, i32) {
    %c0_i32 = arith.constant 0 : i32
    %c0_i32_0 = arith.constant 0 : i32
    return %c0_i32, %arg0 : i32, i32
  }
}

</mosaic_0001>

<llo_original>
// kernel: ce_loss_smooth.1
$region0: #{ce_loss_smooth.1}
  #allocation0 [shape = 'u32[]', space=smem, size = 0x4, offset = 0x4, fixed_abs, tag = 'smem constant byte address 0x4 - core index']
  #allocation1 [shape = 'u32[144,128]{1,0:T(1,128)}', space=vmem, size = 0x12000, scoped, tag = 'internal scratch']
  %s0 = inlined_call_operand.vmem [shape: f32[8,32], index: 0, kind: input, shape index: {}]
  %s1 = inlined_call_operand.vmem [shape: s32[8,1], index: 1, kind: input, shape index: {}]
  %s2 = inlined_call_operand.vmem [shape: f32[8,128], index: 2, kind: output, shape index: {}]
  %s3 = sld [smem:[#allocation0]]
  $region18: #{ce_loss_smooth.1} parent=0
    _
  %s5 = ssub.s32 1, %s3
  %s6 = scalar_select 0, %s5, %s3
  // Predicated region
  $region2: #{ce_loss_smooth.1} parent=0 // pred_check
    _
  $region3: #{ce_loss_smooth.1} parent=0 // pred_check_branch
    %8 = sbr.rel (0) target = $region5
  $region4: #{ce_loss_smooth.1} parent=0 // pred_region
    _
  $region5: #{ce_loss_smooth.1} parent=0 // pred_fallthru
    _
  // Predicated region
  $region6: #{ce_loss_smooth.1} parent=0 // pred_check
    _
  $region7: #{ce_loss_smooth.1} parent=0 // pred_check_branch
    %10 = sbr.rel (0) target = $region9
  $region8: #{ce_loss_smooth.1} parent=0 // pred_region
    _
  $region9: #{ce_loss_smooth.1} parent=0 // pred_fallthru
    _
  %v11 = vld [vmem:[%s0] sm:$0xff]
  %vm12 = vcmask 261120
  %v13 = vsel %vm12, %v11, -inf
  %14 = vmax.xlane.f32.xlu0 %v13
  %v15 = vpop.xlane.xlu0 %14
  %v16 = vsub.f32 %v11, %v15
  %v17 = vmul.f32 %v16, 1.442695
  %v18 = vpow.pop %v17
  %v19 = vsel %vm12, %v18, 0.0
  %20 = vadd.xlane.f32.xlu0 %v19
  %v21 = vpop.xlane.xlu0 %20
  %v22 = vlog2.pop %v21
  %v23 = vmul.f32 %v22, 0.6931472
  %v24 = vsel %vm12, %v16, 0.0
  %25 = vadd.xlane.f32.xlu0 %v24
  %v26 = vpop.xlane.xlu0 %25
  %v27 = vmul.f32 %v23, 32.0
  %v28 = vsub.f32 %v26, %v27
  %v29 = vlaneseq
  %v30 = vand.u32 %v29, 127
  %v31 = vld [vmem:[%s1] sm:$0xff]
  %32 = vset.pattern.permute.xlu0 0
  %33 = vperm.xlu0 %32, %v31
  %v34 = vpop.permute.xlu0 %33
  %vm35 = vcmp.eq.s32.totalorder %v30, %v34
  %v36 = vsel %vm35, %v16, 0.0
  %v37 = vsel %vm12, %v36, 0.0
  %38 = vadd.xlane.f32.xlu0 %v37
  %v39 = vpop.xlane.xlu0 %38
  %v40 = vsub.f32 %v39, %v23
  %v41 = vmul.f32 %v28, 0.0032258064
  %v42 = vmul.f32 %v40, 0.8967742
  %v43 = vadd.f32 %v41, %v42
  %v44 = vsub.f32 0.0, %v43
  %vm45 = vcmask 7168
  %v46 = vsel %vm45, %v44, 0.0
  %47 = vadd.xlane.f32.xlu0 %v46
  %v48 = vpop.xlane.xlu0 %47
  %v49 = vrot.slane %v48, 4
  %v50 = vadd.f32 %v48, %v49
  %v51 = vrot.slane %v50, 2
  %v52 = vadd.f32 %v50, %v51
  %v53 = vrot.slane %v52, 1
  %v54 = vadd.f32 %v52, %v53
  %s55 = vtos %v54
  %v56 = vstv %s55
  %57 = vst [vmem:[%s2] sm:$0xff] %v56
  // Predicated region
  $region10: #{ce_loss_smooth.1} parent=0 // pred_check
    _
  $region11: #{ce_loss_smooth.1} parent=0 // pred_check_branch
    %59 = sbr.rel (0) target = $region13
  $region12: #{ce_loss_smooth.1} parent=0 // pred_region
    _
  $region13: #{ce_loss_smooth.1} parent=0 // pred_fallthru
    _
  // Predicated region
  $region14: #{ce_loss_smooth.1} parent=0 // pred_check
    _
  $region15: #{ce_loss_smooth.1} parent=0 // pred_check_branch
    %61 = sbr.rel (0) target = $region17
  $region16: #{ce_loss_smooth.1} parent=0 // pred_region
    _
  $region17: #{ce_loss_smooth.1} parent=0 // pred_fallthru
    _

</llo_original>
